<compile_context>
chip_gen: v7x
topology: tpu7x:2x2x1
jax: 0.10.0
libtpu: 0.0.40
codegen_flags: <defaults>
</compile_context>

<pallas_src>
import jax
import jax.numpy as jnp
from jax.experimental import pallas as pl
from jax.experimental.pallas import tpu as pltpu


def _round_up(v, m):
    return (v + m - 1) // m * m


def _pad2d(a, rows, cols):
    r, c = a.shape
    if r == rows and c == cols:
        return a  # no-op: avoid a full extra HBM read+write of the array
    return jnp.pad(a, ((0, rows - r), (0, cols - c)))


def quant_linear_kernel(scale_ref, x_ref, w_ref, b_ref, o_ref):
    """One (tm, tn) output tile, accumulating over the K grid axis directly
    into the VMEM-resident output block (block index invariant over k).

    scale_ref : SMEM (1,)  f32   per-tensor activation scale
    x_ref     : VMEM (tm, tk) bf16  (x_q - zp): exact integers in [-255, 255]
    w_ref     : VMEM (tk, tn) bf16  weight tile
    b_ref     : VMEM (1,  tn) f32   bias tile
    o_ref     : VMEM (tm, tn) f32   output tile / accumulator
    """
    k = pl.program_id(2)

    @pl.when(k == 0)
    def _():
        o_ref[...] = jnp.zeros_like(o_ref)

    # MXU matmul: exact bf16 integer activations x bf16 weights, f32 accum.
    o_ref[...] += jnp.dot(
        x_ref[...], w_ref[...], preferred_element_type=jnp.float32
    )

    # DeQuant (fold the per-tensor scale back in) + bias, once, at k==last.
    @pl.when(k == pl.num_programs(2) - 1)
    def _():
        o_ref[...] = o_ref[...] * scale_ref[0] + b_ref[...]


def quant_model(x, w, b, *, tm=512, tn=512, tk=512):
    """x: [B, K] f32, w: [K, N] f32, b: [N] f32 -> [B, N] f32."""
    B, K = x.shape
    Kw, N = w.shape
    assert K == Kw

    # ---- "Observer" calibration + activation fake-quant (one XLA pre-pass).
    # Matches QuantStub's uint8 semantics (zero_point clipped to [0, 255]).
    x_min = jnp.minimum(jnp.min(x), 0.0)
    x_max = jnp.maximum(jnp.max(x), 0.0)
    scale = jnp.maximum((x_max - x_min) / 255.0, 1e-8)
    zp = jnp.clip(jnp.round(-x_min / scale), 0.0, 255.0)
    inv_scale = 1.0 / scale
    # (x_q - zp) is an integer with |.| <= 255 -> exactly representable in
    # bf16; the `* scale` is applied once, post-dot, inside the kernel.
    x_qz = (jnp.clip(jnp.round(x * inv_scale + zp), 0.0, 255.0) - zp).astype(
        jnp.bfloat16
    )
    scale_arr = jnp.reshape(scale, (1,)).astype(jnp.float32)

    # ---- Weights/bias prep: bf16 weights (half the dominant HBM stream).
    w_bf16 = w.astype(jnp.bfloat16)

    # ---- Tile selection: lane-dense output (tn multiple of 128), sublane-
    # aligned rows; pad only when needed (zero rows/cols contribute exactly
    # zero to the matmul and are sliced off at the end).
    tm = min(tm, _round_up(B, 8))
    tn = min(tn, _round_up(N, 128))
    tk = min(tk, _round_up(K, 128))
    Bp, Np, Kp = _round_up(B, tm), _round_up(N, tn), _round_up(K, tk)

    x_p = _pad2d(x_qz, Bp, Kp)
    w_p = _pad2d(w_bf16, Kp, Np)
    b_p = _pad2d(b.reshape(1, N).astype(jnp.float32), 1, Np)

    grid = (Bp // tm, Np // tn, Kp // tk)

    out = pl.pallas_call(
        quant_linear_kernel,
        out_shape=jax.ShapeDtypeStruct((Bp, Np), jnp.float32),
        grid=grid,
        in_specs=[
            pl.BlockSpec(memory_space=pltpu.SMEM),            # scale (1,)
            pl.BlockSpec((tm, tk), lambda i, j, k: (i, k)),   # x_qz tile (bf16)
            pl.BlockSpec((tk, tn), lambda i, j, k: (k, j)),   # W tile  (bf16)
            pl.BlockSpec((1, tn), lambda i, j, k: (0, j)),    # bias tile (f32)
        ],
        out_specs=pl.BlockSpec((tm, tn), lambda i, j, k: (i, j)),
        compiler_params=pltpu.CompilerParams(
            dimension_semantics=("parallel", "parallel", "arbitrary"),
            vmem_limit_bytes=32 * 1024 * 1024,
        ),
    )(scale_arr, x_p, w_p, b_p)

    return out[:B, :N]


if __name__ == "__main__":
    key = jax.random.PRNGKey(0)
    k_x, k_w, k_b = jax.random.split(key, 3)

    B, H_in, H_out = 8, 32, 32
    x = jax.random.normal(k_x, (B, H_in), dtype=jnp.float32)
    w = jax.random.normal(k_w, (H_in, H_out), dtype=jnp.float32) * 0.1
    b = jax.random.normal(k_b, (H_out,), dtype=jnp.float32) * 0.1

    out = quant_model(x, w, b)
    jax.block_until_ready(out)

    # Pure-JAX reference: fake-quant the activation (f32), float linear + bias.
    x_min = jnp.minimum(jnp.min(x), 0.0)
    x_max = jnp.maximum(jnp.max(x), 0.0)
    scale = jnp.maximum((x_max - x_min) / 255.0, 1e-8)
    zp = jnp.clip(jnp.round(-x_min / scale), 0.0, 255.0)
    x_dq = (jnp.clip(jnp.round(x / scale + zp), 0.0, 255.0) - zp) * scale
    ref = jnp.dot(x_dq, w, preferred_element_type=jnp.float32) + b

    assert out.shape == (B, H_out)
    max_err = float(jnp.max(jnp.abs(out - ref)))
    assert max_err < 1e-2, max_err

    print("KERNEL_OK")
</pallas_src>

<mosaic_0001>
module attributes {stable_mosaic.version = 11 : i64} {
  func.func @quant_linear_kernel(%arg0: i32, %arg1: i32, %arg2: i32, %arg3: memref<1xf32, #tpu.memory_space<smem>>, %arg4: memref<8x128xbf16, #tpu.memory_space<vmem>>, %arg5: memref<128x128xbf16, #tpu.memory_space<vmem>>, %arg6: memref<1x128xf32, #tpu.memory_space<vmem>>, %arg7: memref<8x128xf32, #tpu.memory_space<vmem>>) attributes {dimension_semantics = [#tpu.dimension_semantics<parallel>, #tpu.dimension_semantics<parallel>, #tpu.dimension_semantics<arbitrary>], iteration_bounds = array<i64: 1, 1, 1>, scalar_prefetch = 0 : i64, scratch_operands = 0 : i64, tpu.core_type = #tpu.core_type<tc>, window_params = [{transform_indices = @transform_0, window_bounds = array<i64: 1>}, {transform_indices = @transform_1, window_bounds = array<i64: 8, 128>}, {transform_indices = @transform_2, window_bounds = array<i64: 128, 128>}, {transform_indices = @transform_3, window_bounds = array<i64: 1, 128>}, {transform_indices = @transform_4, window_bounds = array<i64: 8, 128>}]} {
    %c0_i32 = arith.constant 0 : i32
    %0 = arith.cmpi eq, %arg2, %c0_i32 : i32
    %1 = arith.extui %0 : i1 to i32
    %c0_i32_0 = arith.constant 0 : i32
    %2 = arith.cmpi ne, %1, %c0_i32_0 : i32
    scf.if %2 {
      %cst_10 = arith.constant 0.000000e+00 : f32
      %12 = vector.broadcast %cst_10 : f32 to vector<8x128xf32>
      %c0_11 = arith.constant 0 : index
      %c0_12 = arith.constant 0 : index
      %13 = vector.load %arg7[%c0_11, %c0_12] : memref<8x128xf32, #tpu.memory_space<vmem>>, vector<8x128xf32>
      tpu.vector_store %arg7[%c0_11, %c0_12], %12 {strides = array<i32>} : memref<8x128xf32, #tpu.memory_space<vmem>>, vector<8x128xf32>,
    } else {
    }
    %c0 = arith.constant 0 : index
    %c0_1 = arith.constant 0 : index
    %3 = vector.load %arg7[%c0, %c0_1] : memref<8x128xf32, #tpu.memory_space<vmem>>, vector<8x128xf32>
    %c0_2 = arith.constant 0 : index
    %c0_3 = arith.constant 0 : index
    %4 = vector.load %arg4[%c0_2, %c0_3] : memref<8x128xbf16, #tpu.memory_space<vmem>>, vector<8x128xbf16>
    %c0_4 = arith.constant 0 : index
    %c0_5 = arith.constant 0 : index
    %5 = vector.load %arg5[%c0_4, %c0_5] : memref<128x128xbf16, #tpu.memory_space<vmem>>, vector<128x128xbf16>
    %cst = arith.constant dense<0.000000e+00> : vector<8x128xf32>
    %6 = tpu.matmul %4, %5, %cst {dimension_numbers = #tpu.dot_dimension_numbers<[1], [0], [0], [1], [0, 0, 1, 1], [], []>} : vector<8x128xbf16>, vector<128x128xbf16>, vector<8x128xf32> -> vector<8x128xf32>
    %7 = arith.addf %3, %6 : vector<8x128xf32>
    %c0_6 = arith.constant 0 : index
    %c0_7 = arith.constant 0 : index
    %8 = vector.load %arg7[%c0_6, %c0_7] : memref<8x128xf32, #tpu.memory_space<vmem>>, vector<8x128xf32>
    tpu.vector_store %arg7[%c0_6, %c0_7], %7 {strides = array<i32>} : memref<8x128xf32, #tpu.memory_space<vmem>>, vector<8x128xf32>,
    %c0_i32_8 = arith.constant 0 : i32
    %9 = arith.cmpi eq, %arg2, %c0_i32_8 : i32
    %10 = arith.extui %9 : i1 to i32
    %c0_i32_9 = arith.constant 0 : i32
    %11 = arith.cmpi ne, %10, %c0_i32_9 : i32
    scf.if %11 {
      %c0_10 = arith.constant 0 : index
      %c0_11 = arith.constant 0 : index
      %12 = vector.load %arg7[%c0_10, %c0_11] : memref<8x128xf32, #tpu.memory_space<vmem>>, vector<8x128xf32>
      %c0_12 = arith.constant 0 : index
      %13 = memref.load %arg3[%c0_12] : memref<1xf32, #tpu.memory_space<smem>>
      %14 = vector.broadcast %13 : f32 to vector<8x128xf32>
      %15 = arith.mulf %12, %14 : vector<8x128xf32>
      %c0_13 = arith.constant 0 : index
      %c0_14 = arith.constant 0 : index
      %16 = vector.load %arg6[%c0_13, %c0_14] : memref<1x128xf32, #tpu.memory_space<vmem>>, vector<1x128xf32>
      %17 = vector.broadcast %16 : vector<1x128xf32> to vector<8x128xf32>
      %18 = arith.addf %15, %17 : vector<8x128xf32>
      %c0_15 = arith.constant 0 : index
      %c0_16 = arith.constant 0 : index
      %19 = vector.load %arg7[%c0_15, %c0_16] : memref<8x128xf32, #tpu.memory_space<vmem>>, vector<8x128xf32>
      tpu.vector_store %arg7[%c0_15, %c0_16], %18 {strides = array<i32>} : memref<8x128xf32, #tpu.memory_space<vmem>>, vector<8x128xf32>,
    } else {
    }
    return
  }
  func.func @transform_0(%arg0: i32, %arg1: i32, %arg2: i32) -> i32 {
    %c0_i32 = arith.constant 0 : i32
    %c0_i32_0 = arith.constant 0 : i32
    return %c0_i32 : i32
  }
  func.func @transform_1(%arg0: i32, %arg1: i32, %arg2: i32) -> (i32, i32) {
    %c0_i32 = arith.constant 0 : i32
    return %arg0, %arg2 : i32, i32
  }
  func.func @transform_2(%arg0: i32, %arg1: i32, %arg2: i32) -> (i32, i32) {
    %c0_i32 = arith.constant 0 : i32
    return %arg2, %arg1 : i32, i32
  }
  func.func @transform_3(%arg0: i32, %arg1: i32, %arg2: i32) -> (i32, i32) {
    %c0_i32 = arith.constant 0 : i32
    %c0_i32_0 = arith.constant 0 : i32
    return %c0_i32, %arg1 : i32, i32
  }
  func.func @transform_4(%arg0: i32, %arg1: i32, %arg2: i32) -> (i32, i32) {
    %c0_i32 = arith.constant 0 : i32
    return %arg0, %arg1 : i32, i32
  }
}

</mosaic_0001>

<llo_original>
// kernel: tpu_custom_call.1
$region0: #{tpu_custom_call.1}
  #allocation0 [shape = 'u32[]', space=smem, size = 0x4, offset = 0x4, fixed_abs, tag = 'smem constant byte address 0x4 - core index']
  #allocation1 [shape = 'u32[144,128]{1,0:T(1,128)}', space=vmem, size = 0x12000, scoped, tag = 'internal scratch']
  #allocation2 [shape = 'f32[1]{0:T(128)S(6)}', space=smem, size = 0x200, scoped, tag = 'scoped memory for tpu_custom_call.1']
  %s0 = inlined_call_operand.<no memory space> [shape: f32[1], index: 0, kind: input, shape index: {}]
  %s1 = inlined_call_operand.hbm [shape: bf16[8,128], index: 1, kind: input, shape index: {}]
  %s2 = inlined_call_operand.hbm [shape: bf16[128,128], index: 2, kind: input, shape index: {}]
  %s3 = inlined_call_operand.vmem [shape: f32[1,128], index: 3, kind: input, shape index: {}]
  %s4 = inlined_call_operand.hbm [shape: f32[8,128], index: 4, kind: output, shape index: {}]
  %s5 = sld [smem:[#allocation0]]
  $region42: #{tpu_custom_call.1} parent=0
    _
  %s7 = ssub.s32 1, %s5
  %s8 = scalar_select 0, %s7, %s5
  %9 = sst [smem:[#allocation2]] %s0
  $region1: #{tpu_custom_call.1} parent=0
    #allocation3 [shape = 'u8[2048]{0}', space=vmem, size = 0x800, scoped, tag = 'input window, operand 1, single buffered']
    #allocation4 [shape = 's32[1]{0}', space=sflag, size = 0x4, scoped, tag = 'scoped memory for tpu_custom_call.1']
    #allocation5 [shape = 's32[1]{0}', space=sflag, size = 0x4, scoped, tag = 'scoped memory for tpu_custom_call.1']
    #allocation6 [shape = 'u8[32768]{0}', space=vmem, size = 0x8000, scoped, tag = 'input window, operand 2, single buffered']
    #allocation7 [shape = 's32[1]{0}', space=sflag, size = 0x4, scoped, tag = 'scoped memory for tpu_custom_call.1']
    #allocation8 [shape = 'u8[4096]{0}', space=vmem, size = 0x1000, scoped, tag = 'output window, operand 0, single buffered']
    %10 = vsyncpa [#allocation4], 0
    %11 = vsyncpa [#allocation7], 0
    %12 = vsyncpa [#allocation5], 0
    // Predicated region
    $region2: #{tpu_custom_call.1} parent=1 // pred_check
      _
    $region3: #{tpu_custom_call.1} parent=1 // pred_check_branch
      %14 = sbr.rel (0) target = $region5
    $region4: #{tpu_custom_call.1} parent=1 // pred_region
      _
    $region5: #{tpu_custom_call.1} parent=1 // pred_fallthru
      _
    // Predicated region
    $region6: #{tpu_custom_call.1} parent=1 // pred_check
      _
    $region7: #{tpu_custom_call.1} parent=1 // pred_check_branch
      %16 = sbr.rel (0) target = $region9
    $region8: #{tpu_custom_call.1} parent=1 // pred_region
      %s18 = ssub.s32 64, 64
      %19 = vsyncadd [#allocation4], %s18
      %s21 = sshll.u32 [#allocation3], 4
      %s22 = int_to_ptr.vmem [resolvable:$true] %s21
      %24 = dma.hbm_to_vmem [thread:$0]  %s1, 64, %s22, [#allocation4]
    $region9: #{tpu_custom_call.1} parent=1 // pred_fallthru
      _
    // Predicated region
    $region10: #{tpu_custom_call.1} parent=1 // pred_check
      _
    $region11: #{tpu_custom_call.1} parent=1 // pred_check_branch
      %26 = sbr.rel (0) target = $region13
    $region12: #{tpu_custom_call.1} parent=1 // pred_region
      %s28 = ssub.s32 1024, 1024
      %29 = vsyncadd [#allocation7], %s28
      %s30 = sshll.u32 [#allocation6], 4
      %s31 = int_to_ptr.vmem [resolvable:$true] %s30
      %36 = dma.hbm_to_vmem [thread:$0]  %s2, 1024, %s31, [#allocation7], 64, 64, 4
    $region13: #{tpu_custom_call.1} parent=1 // pred_fallthru
      _
    // Predicated region
    $region14: #{tpu_custom_call.1} parent=1 // pred_check
      _
    $region15: #{tpu_custom_call.1} parent=1 // pred_check_branch
      %38 = sbr.rel (0) target = $region17
    $region16: #{tpu_custom_call.1} parent=1 // pred_region
      _
    $region17: #{tpu_custom_call.1} parent=1 // pred_fallthru
      _
    // Predicated region
    $region18: #{tpu_custom_call.1} parent=1 // pred_check
      _
    $region19: #{tpu_custom_call.1} parent=1 // pred_check_branch
      %40 = sbr.rel (0) target = $region21
    $region20: #{tpu_custom_call.1} parent=1 // pred_region
      %41 = dma.done [#allocation4], 64
    $region21: #{tpu_custom_call.1} parent=1 // pred_fallthru
      _
    // Predicated region
    $region22: #{tpu_custom_call.1} parent=1 // pred_check
      _
    $region23: #{tpu_custom_call.1} parent=1 // pred_check_branch
      %43 = sbr.rel (0) target = $region25
    $region24: #{tpu_custom_call.1} parent=1 // pred_region
      %44 = dma.done [#allocation7], 1024
    $region25: #{tpu_custom_call.1} parent=1 // pred_fallthru
      _
    %p46 = scmp.eq.s32.totalorder 0, 0
    // Predicated region
    $region26: #{tpu_custom_call.1} parent=1 // pred_check
      %p47 = pneg %p46
    $region27: #{tpu_custom_call.1} parent=1 // pred_check_branch
      %49 = sbr.rel (%p47) target = $region29
    $region28: #{tpu_custom_call.1} parent=1 // pred_region
      %50 = vst [vmem:[#allocation8] sm:$0xff] 0.0
    $region29: #{tpu_custom_call.1} parent=1 // pred_fallthru
      _
    %v51 = vld [vmem:[#allocation8] sm:$0xff]
    %v52 = vld [vmem:[#allocation3] sm:$0xf]
    %v53 = vld [vmem:[#allocation6] sm:$0xf]
    %v54 = vld [vmem:[#allocation6 + $0x4] sm:$0xf]
    %v55 = vld [vmem:[#allocation6 + $0x8] sm:$0xf]
    %v56 = vld [vmem:[#allocation6 + $0xc] sm:$0xf]
    %v57 = vld [vmem:[#allocation6 + $0x10] sm:$0xf]
    %v58 = vld [vmem:[#allocation6 + $0x14] sm:$0xf]
    %v59 = vld [vmem:[#allocation6 + $0x18] sm:$0xf]
    %v60 = vld [vmem:[#allocation6 + $0x1c] sm:$0xf]
    %v61 = vld [vmem:[#allocation6 + $0x20] sm:$0xf]
    %v62 = vld [vmem:[#allocation6 + $0x24] sm:$0xf]
    %v63 = vld [vmem:[#allocation6 + $0x28] sm:$0xf]
    %v64 = vld [vmem:[#allocation6 + $0x2c] sm:$0xf]
    %v65 = vld [vmem:[#allocation6 + $0x30] sm:$0xf]
    %v66 = vld [vmem:[#allocation6 + $0x34] sm:$0xf]
    %v67 = vld [vmem:[#allocation6 + $0x38] sm:$0xf]
    %v68 = vld [vmem:[#allocation6 + $0x3c] sm:$0xf]
    %v85 = vunpack.c.l.b16 %v53
    %v86 = vunpack.c.l.b16 %v54
    %v87 = vunpack.c.l.b16 %v55
    %v88 = vunpack.c.l.b16 %v56
    %v89 = vunpack.c.l.b16 %v57
    %v90 = vunpack.c.l.b16 %v58
    %v91 = vunpack.c.l.b16 %v59
    %v92 = vunpack.c.l.b16 %v60
    %v93 = vunpack.c.l.b16 %v61
    %v94 = vunpack.c.l.b16 %v62
    %v95 = vunpack.c.l.b16 %v63
    %v96 = vunpack.c.l.b16 %v64
    %v97 = vunpack.c.l.b16 %v65
    %v98 = vunpack.c.l.b16 %v66
    %v99 = vunpack.c.l.b16 %v67
    %v100 = vunpack.c.l.b16 %v68
    %v101 = vpack.c.b16 %v86, %v85
    %v102 = vpack.c.b16 %v88, %v87
    %v103 = vpack.c.b16 %v90, %v89
    %v104 = vpack.c.b16 %v92, %v91
    %v105 = vpack.c.b16 %v94, %v93
    %v106 = vpack.c.b16 %v96, %v95
    %v107 = vpack.c.b16 %v98, %v97
    %v108 = vpack.c.b16 %v100, %v99
    %117 = vmatprep.subr.bf16.mxu0 0
    %118 = vmatpush1.bf16.msra.mxu0 %v101
    %119 = vmatprep.subr.bf16.mxu0 0
    %120 = vmatpush1.bf16.msra.mxu0 %v102
    %121 = vmatprep.subr.bf16.mxu0 0
    %122 = vmatpush1.bf16.msra.mxu0 %v103
    %123 = vmatprep.subr.bf16.mxu0 0
    %124 = vmatpush1.bf16.msra.mxu0 %v104
    %125 = vmatprep.subr.bf16.mxu0 0
    %126 = vmatpush1.bf16.msra.mxu0 %v105
    %127 = vmatprep.subr.bf16.mxu0 0
    %128 = vmatpush1.bf16.msra.mxu0 %v106
    %129 = vmatprep.subr.bf16.mxu0 0
    %130 = vmatpush1.bf16.msra.mxu0 %v107
    %131 = vmatprep.subr.bf16.mxu0 0
    %132 = vmatpush1.bf16.msra.mxu0 %v108
    %133 = vmatprep.subr.bf16.mxu0 0
    %134 = vmatpush1.bf16.msra.mxu0 0
    %135 = vmatprep.subr.bf16.mxu0 0
    %136 = vmatpush1.bf16.msra.mxu0 0
    %137 = vmatprep.subr.bf16.mxu0 0
    %138 = vmatpush1.bf16.msra.mxu0 0
    %139 = vmatprep.subr.bf16.mxu0 0
    %140 = vmatpush1.bf16.msra.mxu0 0
    %141 = vmatprep.subr.bf16.mxu0 0
    %142 = vmatpush1.bf16.msra.mxu0 0
    %143 = vmatprep.subr.bf16.mxu0 0
    %144 = vmatpush1.bf16.msra.mxu0 0
    %145 = vmatprep.subr.bf16.mxu0 0
    %146 = vmatpush1.bf16.msra.mxu0 0
    %147 = vmatprep.subr.bf16.mxu0 0
    %148 = vmatpush1.bf16.msra.mxu0 0
    %149 = vmatprep.mubr.bf16.mxu0 0
    %150 = vmatmul.mubr.bf16.gmra.mrb[0].mxu0 %v52
    %v151 = vpop.f32.mrb[0].mxu0
    %v152 = vadd.f32 0.0, %v151
    %v153 = vpop.f32.mrb[0].mxu0
    %v154 = vpop.f32.mrb[0].mxu0
    %v155 = vpop.f32.mrb[0].mxu0
    %156 = vdwg.mxu0
    %v157 = vadd.f32 %v51, %v152
    %158 = vst [vmem:[#allocation8] sm:$0xff] %v157
    // Predicated region
    $region30: #{tpu_custom_call.1} parent=1 // pred_check
      %p159 = pneg %p46
    $region31: #{tpu_custom_call.1} parent=1 // pred_check_branch
      %161 = sbr.rel (%p159) target = $region33
    $region32: #{tpu_custom_call.1} parent=1 // pred_region
      %v162 = vld [vmem:[#allocation8] sm:$0xff]
      %s163 = sld [smem:[#allocation2]]
      %v164 = vstv %s163
      %v165 = vmul.f32 %v162, %v164
      %v166 = vld [vmem:[%s3] sm:$0x1]
      %v168 = vlaneseq
      %v169 = vshrl.u32 %v168, 7
      %v170 = vsub.s32 0, %v169
      %v171 = vrot.slane %v166, %v170
      %v173 = vadd.f32 %v165, %v171
      %174 = vst [vmem:[#allocation8] sm:$0xff] %v173
    $region33: #{tpu_custom_call.1} parent=1 // pred_fallthru
      _
    // Predicated region
    $region34: #{tpu_custom_call.1} parent=1 // pred_check
      _
    $region35: #{tpu_custom_call.1} parent=1 // pred_check_branch
      %176 = sbr.rel (0) target = $region37
    $region36: #{tpu_custom_call.1} parent=1 // pred_region
      %s178 = ssub.s32 128, 128
      %179 = vsyncadd [#allocation5], %s178
      %s181 = sshll.u32 [#allocation8], 4
      %s182 = int_to_ptr.vmem [resolvable:$true] %s181
      %184 = dma.vmem_to_hbm [thread:$0]  %s182, 128, %s4, [#allocation5]
    $region37: #{tpu_custom_call.1} parent=1 // pred_fallthru
      _
    // Predicated region
    $region38: #{tpu_custom_call.1} parent=1 // pred_check
      _
    $region39: #{tpu_custom_call.1} parent=1 // pred_check_branch
      %186 = sbr.rel (0) target = $region41
    $region40: #{tpu_custom_call.1} parent=1 // pred_region
      %187 = dma.done [#allocation5], 128
    $region41: #{tpu_custom_call.1} parent=1 // pred_fallthru
      _
    %188 = vsyncpa [#allocation4], 1
    %189 = vsyncpa [#allocation7], 1
    %190 = vsyncpa [#allocation5], 1

</llo_original>
